<compile_context>
chip_gen: v5e
topology: v5e:2x2
jax: 0.10.0
libtpu: 0.0.40
codegen_flags: <defaults>
</compile_context>

<pallas_src>
import numpy as np
import jax
import jax.numpy as jnp
from jax.experimental import pallas as pl
from jax.experimental.pallas import tpu as pltpu

_LANE = 128     # vreg lane width
_SUB_I8 = 32    # int8 sublane tile
_NSPLIT = 2     # grid size: compare split into 2 blocks (2 TCs on v7x)


def mymodule_kernel(x_ref, w_ref, b_ref, mask_ref, out_ref, cmp_ref):
    # ---- LINEAR PASS (MXU). Tiny (M=8, K=N=128); recomputed per grid step,
    # which is cheaper than communicating the threshold across steps.
    out = jnp.dot(x_ref[...], w_ref[...], preferred_element_type=jnp.float32)
    out = out + b_ref[...]                       # bias broadcast over rows
    out_ref[...] = out.astype(out_ref.dtype)     # each step writes its own block

    # ---- INDEX SCORE: threshold = out.sum(axis=1).mean() == total_sum / rows
    threshold = jnp.sum(out) / jnp.float32(x_ref.shape[0])

    # ---- lane-dense compare of this step's half of the mask (VPU, int8 store)
    cmp_ref[...] = (mask_ref[...] > threshold).astype(jnp.int8)


@jax.jit
def _device_forward(x, w_t, b2, mask):
    M, K = x.shape
    N = w_t.shape[1]

    # Lane-dense layout: flatten the mask and pad with -inf (never exceeds the
    # threshold) up to a multiple of _NSPLIT * 32 * 128 so every block is a
    # legal int8 tile and splits evenly over the grid.
    total = mask.size
    chunk = _NSPLIT * _SUB_I8 * _LANE
    padded = ((total + chunk - 1) // chunk) * chunk
    flat_mask = mask.reshape(-1)
    if padded != total:
        flat_mask = jnp.concatenate(
            [flat_mask, jnp.full((padded - total,), -jnp.inf, mask.dtype)])
    rows = padded // _LANE
    rows_blk = rows // _NSPLIT
    mask2d = flat_mask.reshape(rows, _LANE)

    out_rep, cmp = pl.pallas_call(
        mymodule_kernel,
        out_shape=(
            jax.ShapeDtypeStruct((_NSPLIT * M, N), jnp.float32),
            jax.ShapeDtypeStruct((rows, _LANE), jnp.int8),
        ),
        grid=(_NSPLIT,),
        in_specs=[
            pl.BlockSpec((M, K), lambda i: (0, 0)),
            pl.BlockSpec((K, N), lambda i: (0, 0)),
            pl.BlockSpec((1, N), lambda i: (0, 0)),
            pl.BlockSpec((rows_blk, _LANE), lambda i: (i, 0)),
        ],
        out_specs=(
            pl.BlockSpec((M, N), lambda i: (i, 0)),
            pl.BlockSpec((rows_blk, _LANE), lambda i: (i, 0)),
        ),
        compiler_params=pltpu.CompilerParams(
            dimension_semantics=("parallel",)),
    )(x, w_t, b2, mask2d)

    out = out_rep[:M]                          # grid-step 0's copy of the linear output
    flat_cmp = cmp.reshape(-1) != 0
    count = jnp.sum(flat_cmp.astype(jnp.int32))
    # Static-size nonzero on device (row-major order == torch.nonzero order);
    # the padded tail is all-False so it contributes no indices.
    idx_flat = jnp.nonzero(flat_cmp, size=padded, fill_value=0)[0]
    return out, idx_flat, count


def mymodule_forward(x, weight, bias, mask):
    """x: (M, K) f32; weight: (N, K) f32 (PyTorch layout); bias: (N,) f32;
    mask: (D0, D1, D2) f32.  Returns (out (M, N) f32, hi_idx tuple of 3 index
    arrays), matching MyModule.forward semantics."""
    N = weight.shape[0]
    w_t = weight.T                 # (K, N) so the kernel computes x @ w
    b2 = bias.reshape(1, N)        # keep bias 2-D for TPU layout
    out, idx_flat, count = _device_forward(x, w_t, b2, mask)

    # nonzero(as_tuple=True) has a data-dependent output size: one scalar sync
    # plus a trim/unravel on host; the scan itself already ran on device.
    n = int(count)
    flat_idx = np.asarray(idx_flat)[:n]
    hi_idx = np.unravel_index(flat_idx, mask.shape)
    return out, hi_idx


if __name__ == "__main__":
    # Small shapes consistent with the module's forward:
    #   input (M, in_features), Linear(in_features -> out_features), mask (D, D, D)
    M, K, N = 8, 128, 128          # batch=8, in_features=128, out_features=128
    D = 32                         # mask is (32, 32, 32)

    key = jax.random.PRNGKey(0)
    k_x, k_m, k_w, k_b = jax.random.split(key, 4)

    x = jax.random.uniform(k_x, (M, K), dtype=jnp.float32)          # torch.rand
    mask = jax.random.uniform(k_m, (D, D, D), dtype=jnp.float32)    # torch.rand

    # nn.Linear init: U(-1/sqrt(K), 1/sqrt(K))
    bound = 1.0 / np.sqrt(K)
    weight = jax.random.uniform(k_w, (N, K), dtype=jnp.float32,
                                minval=-bound, maxval=bound)
    bias = jax.random.uniform(k_b, (N,), dtype=jnp.float32,
                              minval=-bound, maxval=bound)

    out, hi_idx = mymodule_forward(x, weight, bias, mask)
    out = jax.block_until_ready(out)

    # ---- sanity check vs. plain JAX/XLA reference ----
    ref_out = np.asarray(x @ weight.T + bias)
    ref_thr = float(ref_out.sum(axis=1).mean())
    assert np.allclose(np.asarray(out), ref_out, atol=1e-4)

    assert len(hi_idx) == 3
    m_np = np.asarray(mask)
    got = np.zeros(m_np.shape, dtype=bool)
    got[hi_idx] = True
    ref_cmp = m_np > ref_thr
    # Reduction order (Pallas/MXU vs XLA) can shift the threshold by ~1e-6;
    # only require agreement away from the decision boundary.
    safe = np.abs(m_np - ref_thr) > 1e-3
    assert np.array_equal(got[safe], ref_cmp[safe])
    # Indices are returned in row-major order, like torch.nonzero.
    if hi_idx[0].size > 1:
        flat = np.ravel_multi_index(hi_idx, m_np.shape)
        assert np.all(np.diff(flat) > 0)

    print("KERNEL_OK")
</pallas_src>

<mosaic_0001>
module attributes {stable_mosaic.version = 11 : i64} {
  func.func @mymodule_kernel(%arg0: i32, %arg1: memref<8x128xf32, #tpu.memory_space<vmem>>, %arg2: memref<128x128xf32, #tpu.memory_space<vmem>>, %arg3: memref<1x128xf32, #tpu.memory_space<vmem>>, %arg4: memref<128x128xf32, #tpu.memory_space<vmem>>, %arg5: memref<8x128xf32, #tpu.memory_space<vmem>>, %arg6: memref<128x128xi8, #tpu.memory_space<vmem>>) attributes {dimension_semantics = [#tpu.dimension_semantics<parallel>], iteration_bounds = array<i64: 2>, scalar_prefetch = 0 : i64, scratch_operands = 0 : i64, tpu.core_type = #tpu.core_type<tc>, window_params = [{pipeline_mode = #tpu.pipeline_mode<synchronous>, transform_indices = @transform_0, window_bounds = array<i64: 8, 128>}, {pipeline_mode = #tpu.pipeline_mode<synchronous>, transform_indices = @transform_1, window_bounds = array<i64: 128, 128>}, {pipeline_mode = #tpu.pipeline_mode<synchronous>, transform_indices = @transform_2, window_bounds = array<i64: 1, 128>}, {transform_indices = @transform_3, window_bounds = array<i64: 128, 128>}, {transform_indices = @transform_4, window_bounds = array<i64: 8, 128>}, {transform_indices = @transform_5, window_bounds = array<i64: 128, 128>}]} {
    %c0 = arith.constant 0 : index
    %c0_0 = arith.constant 0 : index
    %0 = vector.load %arg1[%c0, %c0_0] : memref<8x128xf32, #tpu.memory_space<vmem>>, vector<8x128xf32>
    %c0_1 = arith.constant 0 : index
    %c0_2 = arith.constant 0 : index
    %1 = vector.load %arg2[%c0_1, %c0_2] : memref<128x128xf32, #tpu.memory_space<vmem>>, vector<128x128xf32>
    %cst = arith.constant dense<0.000000e+00> : vector<8x128xf32>
    %2 = tpu.matmul %0, %1, %cst {dimension_numbers = #tpu.dot_dimension_numbers<[1], [0], [0], [1], [0, 0, 1, 1], [], []>} : vector<8x128xf32>, vector<128x128xf32>, vector<8x128xf32> -> vector<8x128xf32>
    %c0_3 = arith.constant 0 : index
    %c0_4 = arith.constant 0 : index
    %3 = vector.load %arg3[%c0_3, %c0_4] : memref<1x128xf32, #tpu.memory_space<vmem>>, vector<1x128xf32>
    %4 = vector.broadcast %3 : vector<1x128xf32> to vector<8x128xf32>
    %5 = arith.addf %2, %4 : vector<8x128xf32>
    %c0_5 = arith.constant 0 : index
    %c0_6 = arith.constant 0 : index
    %6 = vector.load %arg5[%c0_5, %c0_6] : memref<8x128xf32, #tpu.memory_space<vmem>>, vector<8x128xf32>
    tpu.vector_store %arg5[%c0_5, %c0_6], %5 {strides = array<i32>} : memref<8x128xf32, #tpu.memory_space<vmem>>, vector<8x128xf32>,
    %7 = vector.shape_cast %5 : vector<8x128xf32> to vector<1x8x128xf32>
    %cst_7 = arith.constant dense<0.000000e+00> : vector<1xf32>
    %8 = vector.multi_reduction <add>, %7, %cst_7 [1, 2] : vector<1x8x128xf32> to vector<1xf32>
    %9 = vector.shape_cast %8 : vector<1xf32> to vector<1x1x1xf32>
    %10 = vector.extract %9[0, 0, 0] : f32 from vector<1x1x1xf32>
    %cst_8 = arith.constant 8.000000e+00 : f32
    %11 = arith.divf %10, %cst_8 : f32
    %c0_9 = arith.constant 0 : index
    %c0_10 = arith.constant 0 : index
    %12 = vector.load %arg4[%c0_9, %c0_10] : memref<128x128xf32, #tpu.memory_space<vmem>>, vector<128x128xf32>
    %13 = vector.broadcast %11 : f32 to vector<128x128xf32>
    %14 = arith.cmpf ogt, %12, %13 : vector<128x128xf32>
    %15 = arith.extui %14 : vector<128x128xi1> to vector<128x128xi8>
    %c0_11 = arith.constant 0 : index
    %c0_12 = arith.constant 0 : index
    %16 = vector.load %arg6[%c0_11, %c0_12] : memref<128x128xi8, #tpu.memory_space<vmem>>, vector<128x128xi8>
    tpu.vector_store %arg6[%c0_11, %c0_12], %15 {strides = array<i32>} : memref<128x128xi8, #tpu.memory_space<vmem>>, vector<128x128xi8>,
    return
  }
  func.func @transform_0(%arg0: i32) -> (i32, i32) {
    %c0_i32 = arith.constant 0 : i32
    %c0_i32_0 = arith.constant 0 : i32
    %c0_i32_1 = arith.constant 0 : i32
    return %c0_i32, %c0_i32_0 : i32, i32
  }
  func.func @transform_1(%arg0: i32) -> (i32, i32) {
    %c0_i32 = arith.constant 0 : i32
    %c0_i32_0 = arith.constant 0 : i32
    %c0_i32_1 = arith.constant 0 : i32
    return %c0_i32, %c0_i32_0 : i32, i32
  }
  func.func @transform_2(%arg0: i32) -> (i32, i32) {
    %c0_i32 = arith.constant 0 : i32
    %c0_i32_0 = arith.constant 0 : i32
    %c0_i32_1 = arith.constant 0 : i32
    return %c0_i32, %c0_i32_0 : i32, i32
  }
  func.func @transform_3(%arg0: i32) -> (i32, i32) {
    %c0_i32 = arith.constant 0 : i32
    %c0_i32_0 = arith.constant 0 : i32
    return %arg0, %c0_i32 : i32, i32
  }
  func.func @transform_4(%arg0: i32) -> (i32, i32) {
    %c0_i32 = arith.constant 0 : i32
    %c0_i32_0 = arith.constant 0 : i32
    return %arg0, %c0_i32 : i32, i32
  }
  func.func @transform_5(%arg0: i32) -> (i32, i32) {
    %c0_i32 = arith.constant 0 : i32
    %c0_i32_0 = arith.constant 0 : i32
    return %arg0, %c0_i32 : i32, i32
  }
}

</mosaic_0001>

<llo_original>
// kernel: _device_forward.1
$region0: #{_device_forward.1}
  #allocation0 [shape = 'u32[]', space=smem, size = 0x4, offset = 0x4, fixed_abs, tag = 'smem constant byte address 0x4 - core index']
  #allocation1 [shape = 'u32[72,128]{1,0:T(1,128)}', space=vmem, size = 0x9000, scoped, tag = 'internal scratch']
  %s0 = inlined_call_operand.vmem [shape: f32[8,128], index: 0, kind: input, shape index: {}]
  %s1 = inlined_call_operand.vmem [shape: f32[128,128], index: 1, kind: input, shape index: {}]
  %s2 = inlined_call_operand.vmem [shape: f32[1,128], index: 2, kind: input, shape index: {}]
  %s3 = inlined_call_operand.vmem [shape: f32[256,128], index: 3, kind: input, shape index: {}]
  %s4 = inlined_call_operand.vmem [shape: f32[16,128], index: 4, kind: output, shape index: {0}]
  %s5 = inlined_call_operand.vmem [shape: s8[256,128], index: 5, kind: output, shape index: {1}]
  %6 = xla_tuple %s4, %s5
  %s7 = sld [smem:[#allocation0]]
  $region57: #{_device_forward.1} parent=0
    _
  %s9 = ssub.s32 1, %s7
  %s10 = scalar_select 0, %s9, %s7
  loop: start=0, step=1, limit=4
  $region2: #{_device_forward.1} parent=0 // loop_pre_header
    _
  $region3: #{_device_forward.1} parent=0 // loop_header
    %s12 = sphi 0, %s16
    %p13 = scmp.ge.s32.totalorder %s12, 4
    %s20 = sphi 0, %s20
    %s22 = sphi 0, %s20
    %s23 = sphi 0, %s22
    %s37 = sphi 0, %s23
    %s41 = sphi 0, %s41
    %s43 = sphi 0, %s41
    %s44 = sphi 0, %s43
    %s58 = sphi 0, %s44
    %s62 = sphi 0, %s62
    %s64 = sphi 0, %s62
    %s65 = sphi 0, %s64
    %s79 = sphi 0, %s65
    %s85 = sphi 0, %s87
    %s88 = sphi 0, %s85
    %s89 = sphi 0, %s88
    %s105 = sphi 0, %s89
    %s111 = sphi 0, %s113
    %s114 = sphi 0, %s111
    %s115 = sphi 0, %s114
    %s131 = sphi 0, %s115
    %s137 = sphi 0, %s139
    %s140 = sphi 0, %s137
    %s141 = sphi 0, %s140
    %s157 = sphi 0, %s141
  $region4: #{_device_forward.1} parent=0 // loop_header_branch
    %15 = sbr.rel (%p13) target = $region8
  $region5: #{_device_forward.1} parent=0 // loop_body
    %s17 = ssub.s32 %s12, 1
    %s18 = ssub.s32 %s12, 2
    %s19 = sadd.s32 %s12, 1
    %s21 = sadd.s32 %s20, 1
    %p24 = scmp.eq.s32.totalorder %s12, 1
    %p25 = scmp.ne.s32.totalorder %s20, %s22
    %p26 = scmp.eq.s32.totalorder %s12, 0
    %p27 = por %p25, %p26
    %p28 = scmp.ne.s32.totalorder %s20, %s22
    %p29 = scmp.eq.s32.totalorder %s17, 1
    %p30 = por %p28, %p29
    %p31 = scmp.ne.s32.totalorder %s22, %s23
    %p32 = scmp.eq.s32.totalorder %s17, 0
    %p33 = por %p31, %p32
    %p34 = scmp.ne.s32.totalorder %s22, %s23
    %p35 = scmp.eq.s32.totalorder %s18, 1
    %p36 = por %p34, %p35
    %p38 = scmp.ne.s32.totalorder %s23, %s37
    %p39 = scmp.eq.s32.totalorder %s18, 0
    %p40 = por %p38, %p39
    %s42 = sadd.s32 %s41, 1
    %p45 = scmp.eq.s32.totalorder %s12, 1
    %p46 = scmp.ne.s32.totalorder %s41, %s43
    %p47 = scmp.eq.s32.totalorder %s12, 0
    %p48 = por %p46, %p47
    %p49 = scmp.ne.s32.totalorder %s41, %s43
    %p50 = scmp.eq.s32.totalorder %s17, 1
    %p51 = por %p49, %p50
    %p52 = scmp.ne.s32.totalorder %s43, %s44
    %p53 = scmp.eq.s32.totalorder %s17, 0
    %p54 = por %p52, %p53
    %p55 = scmp.ne.s32.totalorder %s43, %s44
    %p56 = scmp.eq.s32.totalorder %s18, 1
    %p57 = por %p55, %p56
    %p59 = scmp.ne.s32.totalorder %s44, %s58
    %p60 = scmp.eq.s32.totalorder %s18, 0
    %p61 = por %p59, %p60
    %s63 = sadd.s32 %s62, 1
    %p66 = scmp.eq.s32.totalorder %s12, 1
    %p67 = scmp.ne.s32.totalorder %s62, %s64
    %p68 = scmp.eq.s32.totalorder %s12, 0
    %p69 = por %p67, %p68
    %p70 = scmp.ne.s32.totalorder %s62, %s64
    %p71 = scmp.eq.s32.totalorder %s17, 1
    %p72 = por %p70, %p71
    %p73 = scmp.ne.s32.totalorder %s64, %s65
    %p74 = scmp.eq.s32.totalorder %s17, 0
    %p75 = por %p73, %p74
    %p76 = scmp.ne.s32.totalorder %s64, %s65
    %p77 = scmp.eq.s32.totalorder %s18, 1
    %p78 = por %p76, %p77
    %p80 = scmp.ne.s32.totalorder %s65, %s79
    %p81 = scmp.eq.s32.totalorder %s18, 0
    %p82 = por %p80, %p81
    %s83 = ssub.s32 %s12, %s19
    %p84 = scmp.eq.s32.totalorder %s83, 0
    %s86 = sadd.s32 %s85, 1
    %s87 = scalar_select %p84, %s85, %s86
    %p90 = pneg %p84
    %p91 = scmp.eq.s32.totalorder %s12, 1
    %p92 = por %p90, %p91
    %p93 = scmp.ne.s32.totalorder %s85, %s88
    %p94 = scmp.eq.s32.totalorder %s12, 0
    %p95 = por %p93, %p94
    %p96 = scmp.ne.s32.totalorder %s85, %s88
    %p97 = scmp.eq.s32.totalorder %s17, 1
    %p98 = por %p96, %p97
    %p99 = scmp.ne.s32.totalorder %s88, %s89
    %p100 = scmp.eq.s32.totalorder %s17, 0
    %p101 = por %p99, %p100
    %p102 = scmp.ne.s32.totalorder %s88, %s89
    %p103 = scmp.eq.s32.totalorder %s18, 1
    %p104 = por %p102, %p103
    %p106 = scmp.ne.s32.totalorder %s89, %s105
    %p107 = scmp.eq.s32.totalorder %s18, 0
    %p108 = por %p106, %p107
    %s109 = ssub.s32 %s12, %s19
    %p110 = scmp.eq.s32.totalorder %s109, 0
    %s112 = sadd.s32 %s111, 1
    %s113 = scalar_select %p110, %s111, %s112
    %p116 = pneg %p110
    %p117 = scmp.eq.s32.totalorder %s12, 1
    %p118 = por %p116, %p117
    %p119 = scmp.ne.s32.totalorder %s111, %s114
    %p120 = scmp.eq.s32.totalorder %s12, 0
    %p121 = por %p119, %p120
    %p122 = scmp.ne.s32.totalorder %s111, %s114
    %p123 = scmp.eq.s32.totalorder %s17, 1
    %p124 = por %p122, %p123
    %p125 = scmp.ne.s32.totalorder %s114, %s115
    %p126 = scmp.eq.s32.totalorder %s17, 0
    %p127 = por %p125, %p126
    %p128 = scmp.ne.s32.totalorder %s114, %s115
    %p129 = scmp.eq.s32.totalorder %s18, 1
    %p130 = por %p128, %p129
    %p132 = scmp.ne.s32.totalorder %s115, %s131
    %p133 = scmp.eq.s32.totalorder %s18, 0
    %p134 = por %p132, %p133
    %s135 = ssub.s32 %s12, %s19
    %p136 = scmp.eq.s32.totalorder %s135, 0
    %s138 = sadd.s32 %s137, 1
    %s139 = scalar_select %p136, %s137, %s138
    %p142 = pneg %p136
    %p143 = scmp.eq.s32.totalorder %s12, 1
    %p144 = por %p142, %p143
    %p145 = scmp.ne.s32.totalorder %s137, %s140
    %p146 = scmp.eq.s32.totalorder %s12, 0
    %p147 = por %p145, %p146
    %p148 = scmp.ne.s32.totalorder %s137, %s140
    %p149 = scmp.eq.s32.totalorder %s17, 1
    %p150 = por %p148, %p149
    %p151 = scmp.ne.s32.totalorder %s140, %s141
    %p152 = scmp.eq.s32.totalorder %s17, 0
    %p153 = por %p151, %p152
    %p154 = scmp.ne.s32.totalorder %s140, %s141
    %p155 = scmp.eq.s32.totalorder %s18, 1
    %p156 = por %p154, %p155
    %p158 = scmp.ne.s32.totalorder %s141, %s157
    %p159 = scmp.eq.s32.totalorder %s18, 0
    %p160 = por %p158, %p159
    %p161 = scmp.le.s32.totalorder 1, %s12
    %p162 = scmp.lt.s32.totalorder %s12, 3
    %p163 = pnand %p161, %p162
    %p164 = pneg %p163
    // Predicated region
    $region9: #{_device_forward.1} parent=5 // pred_check
      _
    $region10: #{_device_forward.1} parent=5 // pred_check_branch
      %166 = sbr.rel (%p163) target = $region12
    $region11: #{_device_forward.1} parent=5 // pred_region
      %s167 = ssub.s32 %s12, 1
      // Predicated region
      $region13: #{_device_forward.1} parent=11 // pred_check
        %p168 = pneg %p33
      $region14: #{_device_forward.1} parent=11 // pred_check_branch
        %170 = sbr.rel (%p168) target = $region16
      $region15: #{_device_forward.1} parent=11 // pred_region
        _
      $region16: #{_device_forward.1} parent=11 // pred_fallthru
        _
      // Predicated region
      $region17: #{_device_forward.1} parent=11 // pred_check
        %p171 = pneg %p54
      $region18: #{_device_forward.1} parent=11 // pred_check_branch
        %173 = sbr.rel (%p171) target = $region20
      $region19: #{_device_forward.1} parent=11 // pred_region
        _
      $region20: #{_device_forward.1} parent=11 // pred_fallthru
        _
      // Predicated region
      $region21: #{_device_forward.1} parent=11 // pred_check
        %p174 = pneg %p75
      $region22: #{_device_forward.1} parent=11 // pred_check_branch
        %176 = sbr.rel (%p174) target = $region24
      $region23: #{_device_forward.1} parent=11 // pred_region
        _
      $region24: #{_device_forward.1} parent=11 // pred_fallthru
        _
    $region12: #{_device_forward.1} parent=5 // pred_fallthru
      _
    %p177 = scmp.lt.s32.totalorder %s12, 2
    // Predicated region
    $region25: #{_device_forward.1} parent=5 // pred_check
      %p178 = pneg %p177
    $region26: #{_device_forward.1} parent=5 // pred_check_branch
      %180 = sbr.rel (%p178) target = $region28
    $region27: #{_device_forward.1} parent=5 // pred_region
      // Predicated region
      $region29: #{_device_forward.1} parent=27 // pred_check
        %p181 = pneg %p95
      $region30: #{_device_forward.1} parent=27 // pred_check_branch
        %183 = sbr.rel (%p181) target = $region32
      $region31: #{_device_forward.1} parent=27 // pred_region
        %s184 = smul.u32 16, %s12
        %p185 = scmp.lt.s32.totalorder %s184, 31
        %s186 = scalar_select %p185, %s184, 31
        %s187 = smul.addr %s186, 8
        %s188 = scalar_lea.vmem %s3, %s187
        %s189 = smul.u32 16, %s12
      $region32: #{_device_forward.1} parent=27 // pred_fallthru
        _
    $region28: #{_device_forward.1} parent=5 // pred_fallthru
      _
    %p190 = scmp.le.s32.totalorder 1, %s12
    %p191 = scmp.lt.s32.totalorder %s12, 3
    %p192 = pnand %p190, %p191
    %p193 = pneg %p192
    // Predicated region
    $region33: #{_device_forward.1} parent=5 // pred_check
      _
    $region34: #{_device_forward.1} parent=5 // pred_check_branch
      %195 = sbr.rel (%p192) target = $region36
    $region35: #{_device_forward.1} parent=5 // pred_region
      %s196 = ssub.s32 %s12, 1
      %p197 = pneg %p33
      %p198 = pneg %p30
      %p199 = pneg %p54
      %p200 = pneg %p51
      %p201 = pneg %p75
      %p202 = pneg %p72
      %s203 = smul.u32 16, %s17
      %p204 = scmp.lt.s32.totalorder %s203, 31
      %s205 = scalar_select %p204, %s203, 31
      %s206 = smul.addr %s205, 8
      %s207 = scalar_lea.vmem %s3, %s206
      %p208 = pneg %p101
      %p209 = pneg %p98
      %p210 = pneg %p127
      %p211 = pneg %p124
      %p212 = scmp.lt.s32.totalorder %s17, 1
      %s213 = scalar_select %p212, %s17, 1
      %s214 = smul.addr %s213, 8
      %s215 = scalar_lea.vmem %s4, %s214
      %p216 = pneg %p153
      %p217 = pneg %p150
      %s218 = smul.u32 16, %s17
      %p219 = scmp.lt.s32.totalorder %s218, 31
      %s220 = scalar_select %p219, %s218, 31
      %s221 = smul.addr %s220, 2
      %s222 = scalar_lea.vmem %s5, %s221
      %s223 = smul.u32 16, %s17
      %p224 = scmp.lt.s32.totalorder %s223, 31
      %s225 = scalar_select %p224, %s223, 31
      %s226 = smul.addr %s225, 8
      %s227 = scalar_lea.vmem %s3, %s226
      %s228 = smul.u32 16, %s17
      %p229 = scmp.lt.s32.totalorder %s17, 1
      %s230 = scalar_select %p229, %s17, 1
      %s231 = smul.addr %s230, 8
      %s232 = scalar_lea.vmem %s4, %s231
      %s233 = smul.u32 16, %s17
      %p234 = scmp.lt.s32.totalorder %s233, 31
      %s235 = scalar_select %p234, %s233, 31
      %s236 = smul.addr %s235, 2
      %s237 = scalar_lea.vmem %s5, %s236
      %s238 = smul.u32 16, %s17
      %v241 = vld [vmem:[%s0] sm:$0xff]
      %v242 = vld [vmem:[%s1] sm:$0xff]
      %v243 = vld [vmem:[%s1 + $0x8] sm:$0xff]
      %v244 = vld [vmem:[%s1 + $0x10] sm:$0xff]
      %v245 = vld [vmem:[%s1 + $0x18] sm:$0xff]
      %v246 = vld [vmem:[%s1 + $0x20] sm:$0xff]
      %v247 = vld [vmem:[%s1 + $0x28] sm:$0xff]
      %v248 = vld [vmem:[%s1 + $0x30] sm:$0xff]
      %v249 = vld [vmem:[%s1 + $0x38] sm:$0xff]
      %v250 = vld [vmem:[%s1 + $0x40] sm:$0xff]
      %v251 = vld [vmem:[%s1 + $0x48] sm:$0xff]
      %v252 = vld [vmem:[%s1 + $0x50] sm:$0xff]
      %v253 = vld [vmem:[%s1 + $0x58] sm:$0xff]
      %v254 = vld [vmem:[%s1 + $0x60] sm:$0xff]
      %v255 = vld [vmem:[%s1 + $0x68] sm:$0xff]
      %v256 = vld [vmem:[%s1 + $0x70] sm:$0xff]
      %v257 = vld [vmem:[%s1 + $0x78] sm:$0xff]
      %v258 = vld [vmem:[%s2] sm:$0x1]
      %v260 = vperm.slane %v258, 0
      %262 = vmatpush.msra.mxu0 %v257
      %263 = vmatpush.msra.mxu0 %v256
      %264 = vmatpush.msra.mxu0 %v255
      %265 = vmatpush.msra.mxu0 %v254
      %266 = vmatpush.msra.mxu0 %v253
      %267 = vmatpush.msra.mxu0 %v252
      %268 = vmatpush.msra.mxu0 %v251
      %269 = vmatpush.msra.mxu0 %v250
      %270 = vmatpush.msra.mxu0 %v249
      %271 = vmatpush.msra.mxu0 %v248
      %272 = vmatpush.msra.mxu0 %v247
      %273 = vmatpush.msra.mxu0 %v246
      %274 = vmatpush.msra.mxu0 %v245
      %275 = vmatpush.msra.mxu0 %v244
      %276 = vmatpush.msra.mxu0 %v243
      %277 = vmatpush.msra.mxu0 %v242
      %278 = vmatmul.f32.gmra.mxu0 %v241
      %v279 = vpop.f32.mrf.mxu0
      %v280 = vadd.f32 %v260, %v279
      %281 = vdwg.mxu0
      %282 = vst [vmem:[%s232] sm:$0xff] %v280
      %283 = vadd.xlane.f32.xlu0 %v280
      %v284 = vpop.xlane.xlu0 %283
      %v285 = vrot.slane %v284, 4
      %v286 = vadd.f32 %v284, %v285
      %v287 = vrot.slane %v286, 2
      %v288 = vadd.f32 %v286, %v287
      %v289 = vrot.slane %v288, 1
      %v290 = vadd.f32 %v288, %v289
      %s291 = vtos %v290
      %v292 = vrcp.pop 8.0
      %v293 = vmul.f32 8.0, %v292
      %v294 = vsub.f32 1.0, %v293
      %v295 = vmul.f32 %v292, %v294
      %v296 = vadd.f32 %v292, %v295
      %vm297 = vweird.f32 %v292
      %v298 = vsel %vm297, %v292, %v296
      %s299 = vtos %v298
      %s300 = smul.f32 %s291, %s299
      %v301 = vld [vmem:[%s227] sm:$0xff]
      %v302 = vld [vmem:[%s227 + $0x8] sm:$0xff]
      %v303 = vld [vmem:[%s227 + $0x10] sm:$0xff]
      %v304 = vld [vmem:[%s227 + $0x18] sm:$0xff]
      %v305 = vld [vmem:[%s227 + $0x20] sm:$0xff]
      %v306 = vld [vmem:[%s227 + $0x28] sm:$0xff]
      %v307 = vld [vmem:[%s227 + $0x30] sm:$0xff]
      %v308 = vld [vmem:[%s227 + $0x38] sm:$0xff]
      %v309 = vld [vmem:[%s227 + $0x40] sm:$0xff]
      %v310 = vld [vmem:[%s227 + $0x48] sm:$0xff]
      %v311 = vld [vmem:[%s227 + $0x50] sm:$0xff]
      %v312 = vld [vmem:[%s227 + $0x58] sm:$0xff]
      %v313 = vld [vmem:[%s227 + $0x60] sm:$0xff]
      %v314 = vld [vmem:[%s227 + $0x68] sm:$0xff]
      %v315 = vld [vmem:[%s227 + $0x70] sm:$0xff]
      %v316 = vld [vmem:[%s227 + $0x78] sm:$0xff]
      %v317 = vstv %s300
      %vm318 = vcmp.gt.f32.partialorder %v301, %v317
      %vm319 = vcmp.gt.f32.partialorder %v302, %v317
      %vm320 = vcmp.gt.f32.partialorder %v303, %v317
      %vm321 = vcmp.gt.f32.partialorder %v304, %v317
      %vm322 = vcmp.gt.f32.partialorder %v305, %v317
      %vm323 = vcmp.gt.f32.partialorder %v306, %v317
      %vm324 = vcmp.gt.f32.partialorder %v307, %v317
      %vm325 = vcmp.gt.f32.partialorder %v308, %v317
      %vm326 = vcmp.gt.f32.partialorder %v309, %v317
      %vm327 = vcmp.gt.f32.partialorder %v310, %v317
      %vm328 = vcmp.gt.f32.partialorder %v311, %v317
      %vm329 = vcmp.gt.f32.partialorder %v312, %v317
      %vm330 = vcmp.gt.f32.partialorder %v313, %v317
      %vm331 = vcmp.gt.f32.partialorder %v314, %v317
      %vm332 = vcmp.gt.f32.partialorder %v315, %v317
      %vm333 = vcmp.gt.f32.partialorder %v316, %v317
      %vm334 = vmpackc.low %vm319, %vm318
      %vm335 = vmpackc.low %vm321, %vm320
      %v336 = vsel %vm334, 16711935, 0
      %v337 = vsel %vm335, 16711935, 0
      %v338 = vpack.c.b8 %v337, %v336
      %vm339 = vnez %v338
      %vm340 = vmpackc.low %vm323, %vm322
      %vm341 = vmpackc.low %vm325, %vm324
      %v342 = vsel %vm340, 16711935, 0
      %v343 = vsel %vm341, 16711935, 0
      %v344 = vpack.c.b8 %v343, %v342
      %vm345 = vnez %v344
      %vm346 = vmpackc.low %vm327, %vm326
      %vm347 = vmpackc.low %vm329, %vm328
      %v348 = vsel %vm346, 16711935, 0
      %v349 = vsel %vm347, 16711935, 0
      %v350 = vpack.c.b8 %v349, %v348
      %vm351 = vnez %v350
      %vm352 = vmpackc.low %vm331, %vm330
      %vm353 = vmpackc.low %vm333, %vm332
      %v354 = vsel %vm352, 16711935, 0
      %v355 = vsel %vm353, 16711935, 0
      %v356 = vpack.c.b8 %v355, %v354
      %vm357 = vnez %v356
      %v358 = vsel %vm339, 16843009, 0
      %v359 = vsel %vm345, 16843009, 0
      %v360 = vsel %vm351, 16843009, 0
      %v361 = vsel %vm357, 16843009, 0
      %v362 = vunpack.c.0.s8 %v358
      %v363 = vunpack.c.1.s8 %v358
      %v364 = vunpack.c.2.s8 %v358
      %v365 = vunpack.c.3.s8 %v358
      %v366 = vunpack.c.0.s8 %v359
      %v367 = vunpack.c.1.s8 %v359
      %v368 = vunpack.c.2.s8 %v359
      %v369 = vunpack.c.3.s8 %v359
      %v370 = vunpack.c.0.s8 %v360
      %v371 = vunpack.c.1.s8 %v360
      %v372 = vunpack.c.2.s8 %v360
      %v373 = vunpack.c.3.s8 %v360
      %v374 = vunpack.c.0.s8 %v361
      %v375 = vunpack.c.1.s8 %v361
      %v376 = vunpack.c.2.s8 %v361
      %v377 = vunpack.c.3.s8 %v361
      %v378 = vpack.c.b16 %v362, %v362
      %v379 = vpack.c.b8 %v378, %v378
      %v380 = vpack.c.b16 %v363, %v363
      %v381 = vpack.c.b8 %v380, %v380
      %v382 = vpack.c.b16 %v364, %v364
      %v383 = vpack.c.b8 %v382, %v382
      %v384 = vpack.c.b16 %v365, %v365
      %v385 = vpack.c.b8 %v384, %v384
      %v386 = vpack.c.b16 %v366, %v366
      %v387 = vpack.c.b8 %v386, %v386
      %v388 = vpack.c.b16 %v367, %v367
      %v389 = vpack.c.b8 %v388, %v388
      %v390 = vpack.c.b16 %v368, %v368
      %v391 = vpack.c.b8 %v390, %v390
      %v392 = vpack.c.b16 %v369, %v369
      %v393 = vpack.c.b8 %v392, %v392
      %v394 = vpack.c.b16 %v370, %v370
      %v395 = vpack.c.b8 %v394, %v394
      %v396 = vpack.c.b16 %v371, %v371
      %v397 = vpack.c.b8 %v396, %v396
      %v398 = vpack.c.b16 %v372, %v372
      %v399 = vpack.c.b8 %v398, %v398
      %v400 = vpack.c.b16 %v373, %v373
      %v401 = vpack.c.b8 %v400, %v400
      %v402 = vpack.c.b16 %v374, %v374
      %v403 = vpack.c.b8 %v402, %v402
      %v404 = vpack.c.b16 %v375, %v375
      %v405 = vpack.c.b8 %v404, %v404
      %v406 = vpack.c.b16 %v376, %v376
      %v407 = vpack.c.b8 %v406, %v406
      %v408 = vpack.c.b16 %v377, %v377
      %v409 = vpack.c.b8 %v408, %v408
      %410 = vst [vmem:[%s237] sm:$0x3] %v379
      %411 = vst [vmem:[%s237 + $0x2] sm:$0x3] %v381
      %412 = vst [vmem:[%s237 + $0x4] sm:$0x3] %v383
      %413 = vst [vmem:[%s237 + $0x6] sm:$0x3] %v385
      %414 = vst [vmem:[%s237 + $0x8] sm:$0x3] %v387
      %415 = vst [vmem:[%s237 + $0xa] sm:$0x3] %v389
      %416 = vst [vmem:[%s237 + $0xc] sm:$0x3] %v391
      %417 = vst [vmem:[%s237 + $0xe] sm:$0x3] %v393
      %418 = vst [vmem:[%s237 + $0x10] sm:$0x3] %v395
      %419 = vst [vmem:[%s237 + $0x12] sm:$0x3] %v397
      %420 = vst [vmem:[%s237 + $0x14] sm:$0x3] %v399
      %421 = vst [vmem:[%s237 + $0x16] sm:$0x3] %v401
      %422 = vst [vmem:[%s237 + $0x18] sm:$0x3] %v403
      %423 = vst [vmem:[%s237 + $0x1a] sm:$0x3] %v405
      %424 = vst [vmem:[%s237 + $0x1c] sm:$0x3] %v407
      %425 = vst [vmem:[%s237 + $0x1e] sm:$0x3] %v409
      %p426 = scmp.lt.s32.totalorder %s17, 1
      %s427 = scalar_select %p426, %s17, 1
      %s428 = smul.addr %s427, 8
      %s429 = scalar_lea.vmem %s4, %s428
      %s430 = smul.u32 16, %s17
      %p431 = scmp.lt.s32.totalorder %s430, 31
      %s432 = scalar_select %p431, %s430, 31
      %s433 = smul.addr %s432, 2
      %s434 = scalar_lea.vmem %s5, %s433
      // Predicated region
      $region37: #{_device_forward.1} parent=35 // pred_check
        %p435 = pneg %p124
      $region38: #{_device_forward.1} parent=35 // pred_check_branch
        %437 = sbr.rel (%p435) target = $region40
      $region39: #{_device_forward.1} parent=35 // pred_region
        _
      $region40: #{_device_forward.1} parent=35 // pred_fallthru
        _
      // Predicated region
      $region41: #{_device_forward.1} parent=35 // pred_check
        %p438 = pneg %p150
      $region42: #{_device_forward.1} parent=35 // pred_check_branch
        %440 = sbr.rel (%p438) target = $region44
      $region43: #{_device_forward.1} parent=35 // pred_region
        %s441 = smul.u32 16, %s17
      $region44: #{_device_forward.1} parent=35 // pred_fallthru
        _
    $region36: #{_device_forward.1} parent=5 // pred_fallthru
      _
    %p442 = scmp.le.s32.totalorder 2, %s12
    // Predicated region
    $region45: #{_device_forward.1} parent=5 // pred_check
      %p443 = pneg %p442
    $region46: #{_device_forward.1} parent=5 // pred_check_branch
      %445 = sbr.rel (%p443) target = $region48
    $region47: #{_device_forward.1} parent=5 // pred_region
      %s446 = ssub.s32 %s12, 2
      // Predicated region
      $region49: #{_device_forward.1} parent=47 // pred_check
        %p447 = pneg %p130
      $region50: #{_device_forward.1} parent=47 // pred_check_branch
        %449 = sbr.rel (%p447) target = $region52
      $region51: #{_device_forward.1} parent=47 // pred_region
        %p450 = scmp.lt.s32.totalorder %s18, 1
        %s451 = scalar_select %p450, %s18, 1
        %s452 = smul.addr %s451, 8
        %s453 = scalar_lea.vmem %s4, %s452
      $region52: #{_device_forward.1} parent=47 // pred_fallthru
        _
      // Predicated region
      $region53: #{_device_forward.1} parent=47 // pred_check
        %p454 = pneg %p156
      $region54: #{_device_forward.1} parent=47 // pred_check_branch
        %456 = sbr.rel (%p454) target = $region56
      $region55: #{_device_forward.1} parent=47 // pred_region
        %s457 = smul.u32 16, %s18
        %p458 = scmp.lt.s32.totalorder %s457, 31
        %s459 = scalar_select %p458, %s457, 31
        %s460 = smul.addr %s459, 2
        %s461 = scalar_lea.vmem %s5, %s460
      $region56: #{_device_forward.1} parent=47 // pred_fallthru
        _
    $region48: #{_device_forward.1} parent=5 // pred_fallthru
      _
  $region6: #{_device_forward.1} parent=0 // loop_footer
    %s16 = sadd.s32 1, %s12
  $region7: #{_device_forward.1} parent=0 // loop_footer_branch
    %11 = sbr.rel target = $region3
  $region8: #{_device_forward.1} parent=0 // loop_exit
    _

</llo_original>
